<compile_context>
chip_gen: v6e
topology: v6e:2x2x1
jax: 0.10.0
libtpu: 0.0.40
codegen_flags: <defaults>
</compile_context>

<pallas_src>
import math

import jax
import jax.numpy as jnp
from jax.experimental import pallas as pl
from jax.experimental.pallas import tpu as pltpu

LANE = 128
MAX_TILE_BYTES = 2 * 1024 * 1024     # ~2 MiB streamed blocks -> near HBM roofline
FUSED_LIMIT_BYTES = 8 * 1024 * 1024  # single-pass VMEM-resident path threshold
FUSED_VMEM_LIMIT = 48 * 1024 * 1024  # explicit scoped-VMEM cap (v7x-safe: 64 MiB phys)
BETA_EPS = 1e-12


def _round_up(v, m):
    return -(-v // m) * m


def _max_block_rows(itemsize):
    """Largest multiple-of-8 row count such that one (rows,128) block is ~2 MiB."""
    return max((MAX_TILE_BYTES // (LANE * itemsize)) // 8 * 8, 8)


# ---------------------------------------------------------------------------
# Kernel 1 (two-pass path): per-block partial max in native dtype.
# Each grid step reduces its (tile_rows, 128) block to one (8, 128) tile of
# column-wise maxima (VALU-only reduce) written to its own output block.
# Ragged trailing rows (partial last block) are masked to dtype-min using the
# scalar-prefetched valid-row count.
# ---------------------------------------------------------------------------
def _partial_max_kernel(nrows_ref, x_ref, o_ref):
    tile_rows = x_ref.shape[0]
    x = x_ref[...]                                          # native dtype (bf16 max is exact)
    row0 = pl.program_id(0) * tile_rows
    row_ids = row0 + jax.lax.broadcasted_iota(jnp.int32, x.shape, 0)
    fill = jnp.asarray(jnp.finfo(x.dtype).min, x.dtype)
    x = jnp.where(row_ids < nrows_ref[0], x, fill)
    o_ref[...] = jnp.max(x.reshape(-1, 8, LANE), axis=0).astype(o_ref.dtype)


def _global_max(x2d):
    rows, lanes = x2d.shape
    tile = min(_max_block_rows(x2d.dtype.itemsize), _round_up(rows, 8))
    nb = pl.cdiv(rows, tile)
    nrows = jnp.array([rows], dtype=jnp.int32)
    partial = pl.pallas_call(
        _partial_max_kernel,
        out_shape=jax.ShapeDtypeStruct((nb * 8, lanes), jnp.float32),
        grid_spec=pltpu.PrefetchScalarGridSpec(
            num_scalar_prefetch=1,
            grid=(nb,),
            in_specs=[pl.BlockSpec((tile, lanes), lambda i, nr: (i, 0))],
            out_specs=pl.BlockSpec((8, lanes), lambda i, nr: (i, 0)),
        ),
        compiler_params=pltpu.CompilerParams(
            dimension_semantics=("parallel",)),
    )(nrows, x2d)
    return jnp.max(partial)  # tiny final reduction in plain JAX


# ---------------------------------------------------------------------------
# Kernel 2 (two-pass path): elementwise clip -> quantize -> rescale.
# Scalar prefetch: [beta, s1 = q/beta, s2 = beta/q].  Quant math stays f32.
# Partial trailing block: garbage input rows are computed on and discarded on
# store (never read back), so no masking is needed here.
# ---------------------------------------------------------------------------
def _quant_kernel(scalars_ref, x_ref, o_ref):
    beta = scalars_ref[0]
    s1 = scalars_ref[1]
    s2 = scalars_ref[2]
    x = x_ref[...].astype(jnp.float32)
    clipped = jnp.minimum(jnp.maximum(x, 0.0), beta)   # ClipFunc.forward
    o_ref[...] = (jnp.round(clipped * s1) * s2).astype(o_ref.dtype)


def _repact_elementwise(x2d, scalars):
    rows, lanes = x2d.shape
    max_rows = _max_block_rows(x2d.dtype.itemsize)
    tile = rows if rows <= max_rows else max_rows
    nb = pl.cdiv(rows, tile)
    return pl.pallas_call(
        _quant_kernel,
        out_shape=jax.ShapeDtypeStruct((rows, lanes), x2d.dtype),
        grid_spec=pltpu.PrefetchScalarGridSpec(
            num_scalar_prefetch=1,
            grid=(nb,),
            in_specs=[pl.BlockSpec((tile, lanes), lambda i, s: (i, 0))],
            out_specs=pl.BlockSpec((tile, lanes), lambda i, s: (i, 0)),
        ),
        compiler_params=pltpu.CompilerParams(
            dimension_semantics=("parallel",)),
    )(scalars, x2d)


# ---------------------------------------------------------------------------
# Fused single-pass kernel (training, x fits in VMEM): max -> EMA -> beta ->
# quantize in one HBM read + one HBM write.  Scalar prefetch:
# [ema_old, sigmoid(alpha), 1 - 0.9**t_new, qscale].  beta stays a (1,1) VMEM
# value so all glue lowers as plain vector ops.
# ---------------------------------------------------------------------------
def _fused_kernel(scalars_ref, x_ref, o_ref, ema_ref):
    ema_old = scalars_ref[0]
    sig_alpha = scalars_ref[1]
    denom = scalars_ref[2]
    qscale = scalars_ref[3]
    xf = x_ref[...].astype(jnp.float32)
    m = jnp.max(xf, axis=0, keepdims=True)          # (1, 128)
    m = jnp.max(m, axis=1, keepdims=True)           # (1, 1) global max
    ema_new = 0.9 * ema_old + 0.1 * m
    beta = sig_alpha * (ema_new / denom)
    beta = jnp.maximum(beta, BETA_EPS)              # guard the divide
    s1 = qscale / beta
    s2 = beta / qscale
    clipped = jnp.minimum(jnp.maximum(xf, 0.0), beta)
    o_ref[...] = (jnp.round(clipped * s1) * s2).astype(o_ref.dtype)
    ema_ref[...] = ema_new                          # unguarded EMA buffer update


def _repact_fused_train(x2d, scalars):
    rows, lanes = x2d.shape
    return pl.pallas_call(
        _fused_kernel,
        out_shape=(jax.ShapeDtypeStruct((rows, lanes), x2d.dtype),
                   jax.ShapeDtypeStruct((1, 1), jnp.float32)),
        grid_spec=pltpu.PrefetchScalarGridSpec(
            num_scalar_prefetch=1,
            grid=(1,),
            in_specs=[pl.BlockSpec((rows, lanes), lambda i, s: (0, 0))],
            out_specs=(pl.BlockSpec((rows, lanes), lambda i, s: (0, 0)),
                       pl.BlockSpec((1, 1), lambda i, s: (0, 0))),
        ),
        compiler_params=pltpu.CompilerParams(
            dimension_semantics=("arbitrary",),
            vmem_limit_bytes=FUSED_VMEM_LIMIT),
    )(scalars, x2d)


# ---------------------------------------------------------------------------
# Module-equivalent forward. Returns (out, ema, t).
# ---------------------------------------------------------------------------
def repact_forward(x, alpha_param, ema, t, p=4, training=True,
                   fused_limit_bytes=FUSED_LIMIT_BYTES):
    orig_shape = x.shape
    dtype = x.dtype
    n = x.size
    rows = -(-n // LANE)            # ceil(n / 128)
    pad = rows * LANE - n

    flat = x.reshape(-1)
    if pad:
        # Only non-lane-aligned sizes pay this (<128-element) pad; value is
        # dtype-min (neutral for max, quantizes to 0 and is sliced off below).
        fill = jnp.asarray(jnp.finfo(dtype).min, dtype)
        flat = jnp.concatenate([flat, jnp.full((pad,), fill, dtype=dtype)])
    x2d = flat.reshape(rows, LANE)  # free reshape (row-major view)

    t_new = t + 1 if training else t
    sig_alpha = jax.nn.sigmoid(jnp.asarray(alpha_param, jnp.float32))
    denom = 1.0 - jnp.float32(0.9) ** jnp.asarray(t_new, jnp.float32)
    qscale = jnp.float32(2.0 ** p - 1.0)
    bytes_total = rows * LANE * x.dtype.itemsize

    if training and bytes_total <= fused_limit_bytes:
        # Fused: 1 HBM read + 1 HBM write, single dispatch.
        scalars = jnp.stack(
            [jnp.asarray(ema, jnp.float32), sig_alpha, denom, qscale])
        out2d, ema2d = _repact_fused_train(x2d, scalars)
        ema_new = ema2d[0, 0]
    else:
        if training:
            x_max = _global_max(x2d)                       # Pallas reduction
            ema_new = 0.9 * jnp.asarray(ema, jnp.float32) + 0.1 * x_max
        else:
            ema_new = jnp.asarray(ema, jnp.float32)
        beta = sig_alpha * (ema_new / denom)
        beta = jnp.maximum(beta, BETA_EPS)                 # guard the divide
        scalars = jnp.stack([beta, qscale / beta, beta / qscale])
        out2d = _repact_elementwise(x2d, scalars)          # Pallas elementwise

    out = out2d
    if pad:
        out = out.reshape(-1)[:n]
    return out.reshape(orig_shape), ema_new, t_new


# ---------------------------------------------------------------------------
# Pure-JAX reference (mirrors the PyTorch module; quantizer written with the
# algebraically-identical precomputed scalars).
# ---------------------------------------------------------------------------
def repact_reference(x, alpha_param, ema, t, p=4):
    xf = x.astype(jnp.float32)
    t = t + 1
    ema = 0.9 * jnp.asarray(ema, jnp.float32) + 0.1 * jnp.max(xf)
    denom = 1.0 - jnp.float32(0.9) ** jnp.asarray(t, jnp.float32)
    beta = jax.nn.sigmoid(jnp.asarray(alpha_param, jnp.float32)) * (ema / denom)
    qscale = jnp.float32(2.0 ** p - 1.0)
    clipped = jnp.minimum(jnp.maximum(xf, 0.0), beta)
    out = jnp.round(clipped * (qscale / beta)) * (beta / qscale)
    return out.astype(x.dtype), ema, t


if __name__ == "__main__":
    # Parameter init matching REPACT.__init__(shape, p, alpha):
    #   p forced to 4; alpha_arg = 2.0 -> alpha = 1/2 -> ainit = logit(0.5) = 0
    alpha_arg = 2.0
    a = 1.0 / alpha_arg
    ainit = math.log(a / (1.0 - a))
    alpha_param = jnp.float32(ainit)
    ema0 = jnp.float32(0.0)
    t0 = jnp.int32(0)
    p = 4

    key = jax.random.PRNGKey(0)

    # Test 1: f32 NCHW activation -> fused single-pass path (fits in VMEM).
    x = jax.random.normal(key, (2, 4, 16, 16), dtype=jnp.float32)
    out, ema1, t1 = repact_forward(x, alpha_param, ema0, t0, p=p, training=True)
    out = jax.block_until_ready(out)
    ref, ema_ref, t_ref = repact_reference(x, alpha_param, ema0, t0, p=p)
    assert out.shape == x.shape and out.dtype == x.dtype
    assert jnp.allclose(out, ref, atol=1e-5, rtol=1e-5), "f32 fused mismatch"
    assert jnp.allclose(ema1, ema_ref, atol=1e-6, rtol=1e-6), "ema mismatch"
    assert int(t1) == int(t_ref), "t mismatch"

    # Test 2: bf16 input, awkward (non-lane-aligned) shape -> fused path + lane pad.
    x_bf = jax.random.normal(jax.random.PRNGKey(0), (3, 5, 7, 9), dtype=jnp.bfloat16)
    out_bf, _, _ = repact_forward(x_bf, alpha_param, ema0, t0, p=p, training=True)
    out_bf = jax.block_until_ready(out_bf)
    ref_bf, _, _ = repact_reference(x_bf, alpha_param, ema0, t0, p=p)
    assert out_bf.shape == x_bf.shape and out_bf.dtype == x_bf.dtype
    assert jnp.allclose(out_bf.astype(jnp.float32), ref_bf.astype(jnp.float32),
                        atol=1e-2, rtol=1e-2), "bf16 fused mismatch"

    # Test 3: force the two-pass streaming path (partial trailing block + mask).
    x_big = jax.random.normal(jax.random.PRNGKey(1), (4, 4, 320, 128),
                              dtype=jnp.float32)  # rows=5120 > 4096-row tile
    out_big, ema_b, t_b = repact_forward(x_big, alpha_param, ema0, t0, p=p,
                                         training=True, fused_limit_bytes=0)
    out_big = jax.block_until_ready(out_big)
    ref_big, ema_rb, t_rb = repact_reference(x_big, alpha_param, ema0, t0, p=p)
    assert jnp.allclose(out_big, ref_big, atol=1e-6, rtol=1e-6), "two-pass mismatch"
    assert jnp.allclose(ema_b, ema_rb, atol=1e-6, rtol=1e-6), "two-pass ema mismatch"
    assert int(t_b) == int(t_rb)

    # Test 4: eval mode (no EMA/t update) -> quantize-only kernel.
    out_ev, ema_ev, t_ev = repact_forward(x, alpha_param, ema1, t1, p=p,
                                          training=False)
    out_ev = jax.block_until_ready(out_ev)
    denom = 1.0 - jnp.float32(0.9) ** jnp.asarray(t1, jnp.float32)
    beta = jax.nn.sigmoid(alpha_param) * (ema1 / denom)
    qs = jnp.float32(2.0 ** p - 1.0)
    ref_ev = jnp.round(jnp.minimum(jnp.maximum(x, 0.0), beta) * (qs / beta)) * (beta / qs)
    assert jnp.allclose(out_ev, ref_ev, atol=1e-5, rtol=1e-5), "eval mismatch"
    assert int(t_ev) == int(t1) and jnp.allclose(ema_ev, ema1)

    print("KERNEL_OK")
</pallas_src>

<mosaic_0001>
module attributes {stable_mosaic.version = 11 : i64} {
  func.func @_fused_kernel(%arg0: i32, %arg1: memref<4xf32, #tpu.memory_space<smem>>, %arg2: memref<16x128xf32, #tpu.memory_space<vmem>>, %arg3: memref<16x128xf32, #tpu.memory_space<vmem>>, %arg4: memref<1x1xf32, #tpu.memory_space<vmem>>) attributes {dimension_semantics = [#tpu.dimension_semantics<arbitrary>], iteration_bounds = array<i64: 1>, scalar_prefetch = 1 : i64, scratch_operands = 0 : i64, tpu.core_type = #tpu.core_type<tc>, window_params = [{pipeline_mode = #tpu.pipeline_mode<synchronous>, transform_indices = @transform_0, window_bounds = array<i64: 16, 128>}, {pipeline_mode = #tpu.pipeline_mode<synchronous>, transform_indices = @transform_1, window_bounds = array<i64: 16, 128>}, {pipeline_mode = #tpu.pipeline_mode<synchronous>, transform_indices = @transform_2, window_bounds = array<i64: 1, 1>}]} {
    %c0 = arith.constant 0 : index
    %0 = memref.load %arg1[%c0] : memref<4xf32, #tpu.memory_space<smem>>
    %c1 = arith.constant 1 : index
    %1 = memref.load %arg1[%c1] : memref<4xf32, #tpu.memory_space<smem>>
    %c2 = arith.constant 2 : index
    %2 = memref.load %arg1[%c2] : memref<4xf32, #tpu.memory_space<smem>>
    %c3 = arith.constant 3 : index
    %3 = memref.load %arg1[%c3] : memref<4xf32, #tpu.memory_space<smem>>
    %c0_0 = arith.constant 0 : index
    %c0_1 = arith.constant 0 : index
    %4 = vector.load %arg2[%c0_0, %c0_1] : memref<16x128xf32, #tpu.memory_space<vmem>>, vector<16x128xf32>
    %cst = arith.constant dense<0xFF800000> : vector<128xf32>
    %5 = vector.multi_reduction <maximumf>, %4, %cst [0] : vector<16x128xf32> to vector<128xf32>
    %6 = vector.shape_cast %5 : vector<128xf32> to vector<1x128xf32>
    %cst_2 = arith.constant dense<0xFF800000> : vector<1xf32>
    %7 = vector.multi_reduction <maximumf>, %6, %cst_2 [1] : vector<1x128xf32> to vector<1xf32>
    %8 = vector.shape_cast %7 : vector<1xf32> to vector<1x1xf32>
    %cst_3 = arith.constant 0.899999976 : f32
    %9 = arith.mulf %cst_3, %0 : f32
    %cst_4 = arith.constant 1.000000e-01 : f32
    %10 = vector.broadcast %cst_4 : f32 to vector<1x1xf32>
    %11 = arith.mulf %10, %8 : vector<1x1xf32>
    %12 = vector.broadcast %9 : f32 to vector<1x1xf32>
    %13 = arith.addf %12, %11 : vector<1x1xf32>
    %14 = vector.broadcast %2 : f32 to vector<1x1xf32>
    %15 = arith.divf %13, %14 : vector<1x1xf32>
    %16 = vector.broadcast %1 : f32 to vector<1x1xf32>
    %17 = arith.mulf %16, %15 : vector<1x1xf32>
    %cst_5 = arith.constant 9.99999996E-13 : f32
    %18 = vector.broadcast %cst_5 : f32 to vector<1x1xf32>
    %19 = arith.maximumf %17, %18 : vector<1x1xf32>
    %20 = vector.broadcast %3 : f32 to vector<1x1xf32>
    %21 = arith.divf %20, %19 : vector<1x1xf32>
    %22 = vector.broadcast %3 : f32 to vector<1x1xf32>
    %23 = arith.divf %19, %22 : vector<1x1xf32>
    %cst_6 = arith.constant 0.000000e+00 : f32
    %24 = vector.broadcast %cst_6 : f32 to vector<16x128xf32>
    %25 = arith.maximumf %4, %24 : vector<16x128xf32>
    %26 = vector.broadcast %19 : vector<1x1xf32> to vector<16x128xf32>
    %27 = arith.minimumf %25, %26 : vector<16x128xf32>
    %28 = vector.broadcast %21 : vector<1x1xf32> to vector<16x128xf32>
    %29 = arith.mulf %27, %28 : vector<16x128xf32>
    %30 = math.roundeven %29 : vector<16x128xf32>
    %31 = vector.broadcast %23 : vector<1x1xf32> to vector<16x128xf32>
    %32 = arith.mulf %30, %31 : vector<16x128xf32>
    %c0_7 = arith.constant 0 : index
    %c0_8 = arith.constant 0 : index
    %33 = vector.load %arg3[%c0_7, %c0_8] : memref<16x128xf32, #tpu.memory_space<vmem>>, vector<16x128xf32>
    tpu.vector_store %arg3[%c0_7, %c0_8], %32 {strides = array<i32>} : memref<16x128xf32, #tpu.memory_space<vmem>>, vector<16x128xf32>,
    %c0_9 = arith.constant 0 : index
    %c0_10 = arith.constant 0 : index
    %34 = vector.load %arg4[%c0_9, %c0_10] : memref<1x1xf32, #tpu.memory_space<vmem>>, vector<1x1xf32>
    tpu.vector_store %arg4[%c0_9, %c0_10], %13 {strides = array<i32>} : memref<1x1xf32, #tpu.memory_space<vmem>>, vector<1x1xf32>,
    return
  }
  func.func @transform_0(%arg0: i32, %arg1: memref<4xf32, #tpu.memory_space<smem>>) -> (i32, i32) {
    %c0_i32 = arith.constant 0 : i32
    %c0_i32_0 = arith.constant 0 : i32
    %c0_i32_1 = arith.constant 0 : i32
    return %c0_i32, %c0_i32_0 : i32, i32
  }
  func.func @transform_1(%arg0: i32, %arg1: memref<4xf32, #tpu.memory_space<smem>>) -> (i32, i32) {
    %c0_i32 = arith.constant 0 : i32
    %c0_i32_0 = arith.constant 0 : i32
    %c0_i32_1 = arith.constant 0 : i32
    return %c0_i32, %c0_i32_0 : i32, i32
  }
  func.func @transform_2(%arg0: i32, %arg1: memref<4xf32, #tpu.memory_space<smem>>) -> (i32, i32) {
    %c0_i32 = arith.constant 0 : i32
    %c0_i32_0 = arith.constant 0 : i32
    %c0_i32_1 = arith.constant 0 : i32
    return %c0_i32, %c0_i32_0 : i32, i32
  }
}

</mosaic_0001>

<llo_original>
// kernel: tpu_custom_call.1
$region0: #{tpu_custom_call.1}
  #allocation0 [shape = 'u32[]', space=smem, size = 0x4, offset = 0x4, fixed_abs, tag = 'smem constant byte address 0x4 - core index']
  #allocation1 [shape = 'u32[144,128]{1,0:T(1,128)}', space=vmem, size = 0x12000, scoped, tag = 'internal scratch']
  #allocation2 [shape = 's32[1]{0}', space=sflag, size = 0x4, scoped, tag = 'scoped memory for tpu_custom_call.1']
  #allocation3 [shape = 'u8[512]{0}', space=smem, size = 0x200, scoped, tag = 'prefetched SMEM operand 0']
  %s0 = inlined_call_operand.hbm [shape: f32[4], index: 0, kind: input, shape index: {}]
  %s1 = inlined_call_operand.hbm [shape: f32[16,128], index: 1, kind: input, shape index: {}]
  %s2 = inlined_call_operand.hbm [shape: f32[16,128], index: 2, kind: output, shape index: {0}]
  %s3 = inlined_call_operand.hbm [shape: f32[1,1], index: 3, kind: output, shape index: {1}]
  %4 = xla_tuple %s2, %s3
  %s5 = sld [smem:[#allocation0]]
  $region26: #{tpu_custom_call.1} parent=0
    _
  %s7 = ssub.s32 1, %s5
  %s8 = scalar_select 0, %s7, %s5
  %10 = dma.hbm_to_smem %s0, 16, [#allocation3], [#allocation2]
  %11 = dma.done [#allocation2], 16
  %12 = sfence
  $region1: #{tpu_custom_call.1} parent=0
    #allocation4 [shape = 'u8[8192]{0}', space=vmem, size = 0x2000, scoped, tag = 'input window, operand 1, single buffered']
    #allocation5 [shape = 's32[1]{0}', space=sflag, size = 0x4, scoped, tag = 'scoped memory for tpu_custom_call.1']
    #allocation6 [shape = 's32[1]{0}', space=sflag, size = 0x4, scoped, tag = 'scoped memory for tpu_custom_call.1']
    #allocation7 [shape = 'u8[8192]{0}', space=vmem, size = 0x2000, scoped, tag = 'output window, operand 0, single buffered']
    #allocation8 [shape = 'u8[512]{0}', space=vmem, size = 0x400, scoped, tag = 'output window, operand 1, single buffered']
    #allocation9 [shape = 's32[1]{0}', space=sflag, size = 0x4, scoped, tag = 'scoped memory for tpu_custom_call.1']
    %13 = vsyncpa [#allocation5], 0
    %14 = vsyncpa [#allocation6], 0
    %15 = vsyncpa [#allocation9], 0
    // Predicated region
    $region2: #{tpu_custom_call.1} parent=1 // pred_check
      _
    $region3: #{tpu_custom_call.1} parent=1 // pred_check_branch
      %17 = sbr.rel (0) target = $region5
    $region4: #{tpu_custom_call.1} parent=1 // pred_region
      %s19 = ssub.s32 256, 256
      %20 = vsyncadd [#allocation5], %s19
      %s21 = sshll.u32 [#allocation4], 4
      %s22 = int_to_ptr.vmem [resolvable:$true] %s21
      %27 = dma.hbm_to_vmem [thread:$0]  %s1, 256, %s22, [#allocation5], 128, 128, 8
    $region5: #{tpu_custom_call.1} parent=1 // pred_fallthru
      _
    // Predicated region
    $region6: #{tpu_custom_call.1} parent=1 // pred_check
      _
    $region7: #{tpu_custom_call.1} parent=1 // pred_check_branch
      %29 = sbr.rel (0) target = $region9
    $region8: #{tpu_custom_call.1} parent=1 // pred_region
      %30 = dma.done [#allocation5], 256
    $region9: #{tpu_custom_call.1} parent=1 // pred_fallthru
      _
    %s31 = sld [smem:[#allocation3]]
    %s32 = sld [smem:[#allocation3 + $0x1]]
    %s33 = sld [smem:[#allocation3 + $0x2]]
    %s34 = sld [smem:[#allocation3 + $0x3]]
    %v35 = vld [vmem:[#allocation4] sm:$0xff]
    %v36 = vld [vmem:[#allocation4 + $0x8] sm:$0xff]
    %v37 = vmax.f32 %v35, %v36
    %v38 = vrot.slane %v37, 4
    %v39 = vmax.f32 %v37, %v38
    %v40 = vrot.slane %v39, 2
    %v41 = vmax.f32 %v39, %v40
    %v42 = vrot.slane %v41, 1
    %v43 = vmax.f32 %v41, %v42
    %44 = vmax.xlane.f32.xlu0 %v43
    %v45 = vpop.xlane.xlu0 %44
    %s46 = smul.f32 %s31, 0.9
    %v47 = vmul.f32 %v45, 0.1
    %v48 = vstv %s46
    %v49 = vadd.f32 %v48, %v47
    %v50 = vstv %s33
    %v51 = vrcp.pop %v50
    %v52 = vmul.f32 %v49, %v51
    %v53 = vstv %s32
    %v54 = vmul.f32 %v53, %v52
    %v55 = vmax.f32 %v54, 1e-12
    %v56 = vstv %s34
    %v57 = vrcp.pop %v55
    %v58 = vmul.f32 %v56, %v57
    %v59 = vrcp.pop %v56
    %v60 = vmul.f32 %v55, %v59
    %v61 = vmax.f32 %v35, 0.0
    %v62 = vmax.f32 %v36, 0.0
    %v63 = vmin.f32 %v61, %v55
    %v64 = vmin.f32 %v62, %v55
    %v65 = vmul.f32 %v63, %v58
    %v66 = vmul.f32 %v64, %v58
    %v67 = vround.ne.pseudo %v65
    %v68 = vround.ne.pseudo %v66
    %v69 = vmul.f32 %v67, %v60
    %v70 = vmul.f32 %v68, %v60
    %71 = vst [vmem:[#allocation7] sm:$0xff] %v69
    %72 = vst [vmem:[#allocation7 + $0x8] sm:$0xff] %v70
    %vm73 = vcmask 0
    %74 = vst.msk [vmem:[#allocation8] sm:$0x1] %vm73, %v49
    // Predicated region
    $region10: #{tpu_custom_call.1} parent=1 // pred_check
      _
    $region11: #{tpu_custom_call.1} parent=1 // pred_check_branch
      %76 = sbr.rel (0) target = $region13
    $region12: #{tpu_custom_call.1} parent=1 // pred_region
      %s78 = ssub.s32 256, 256
      %79 = vsyncadd [#allocation6], %s78
      %s80 = sshll.u32 [#allocation7], 4
      %s81 = int_to_ptr.vmem [resolvable:$true] %s80
      %86 = dma.vmem_to_hbm [thread:$0]  %s81, 256, %s2, [#allocation6], 128, 128, 8
    $region13: #{tpu_custom_call.1} parent=1 // pred_fallthru
      _
    // Predicated region
    $region14: #{tpu_custom_call.1} parent=1 // pred_check
      _
    $region15: #{tpu_custom_call.1} parent=1 // pred_check_branch
      %88 = sbr.rel (0) target = $region17
    $region16: #{tpu_custom_call.1} parent=1 // pred_region
      %s90 = ssub.s32 16, 16
      %91 = vsyncadd [#allocation9], %s90
      %s93 = sshll.u32 [#allocation8], 4
      %s94 = int_to_ptr.vmem [resolvable:$true] %s93
      %96 = dma.vmem_to_hbm [thread:$0]  %s94, 16, %s3, [#allocation9]
    $region17: #{tpu_custom_call.1} parent=1 // pred_fallthru
      _
    // Predicated region
    $region18: #{tpu_custom_call.1} parent=1 // pred_check
      _
    $region19: #{tpu_custom_call.1} parent=1 // pred_check_branch
      %98 = sbr.rel (0) target = $region21
    $region20: #{tpu_custom_call.1} parent=1 // pred_region
      %99 = dma.done [#allocation6], 256
    $region21: #{tpu_custom_call.1} parent=1 // pred_fallthru
      _
    // Predicated region
    $region22: #{tpu_custom_call.1} parent=1 // pred_check
      _
    $region23: #{tpu_custom_call.1} parent=1 // pred_check_branch
      %101 = sbr.rel (0) target = $region25
    $region24: #{tpu_custom_call.1} parent=1 // pred_region
      %102 = dma.done [#allocation9], 16
    $region25: #{tpu_custom_call.1} parent=1 // pred_fallthru
      _
    %103 = vsyncpa [#allocation5], 1
    %104 = vsyncpa [#allocation6], 1
    %105 = vsyncpa [#allocation9], 1

</llo_original>
